<compile_context>
chip_gen: v6e
topology: v6e:2x2x1
jax: 0.10.0
libtpu: 0.0.40
codegen_flags: <defaults>
</compile_context>

<pallas_src>
import functools
import math

import jax
import jax.numpy as jnp
from jax import lax
from jax.experimental import pallas as pl
from jax.experimental.pallas import tpu as pltpu

_VMEM_LIMIT = 24 * 1024 * 1024


# ------------------------------ tile helper ---------------------------------

def _choose_tile(dim, preferred, align):
    """Largest tile <= preferred that divides `dim` and is `align`-aligned,
    falling back to the full dimension (always legal on TPU)."""
    if dim <= preferred:
        return dim
    for t in range(preferred, align - 1, -1):
        if dim % t == 0 and t % align == 0:
            return t
    # TODO(synk): for awkward dims with no aligned divisor this falls back to a
    # full-extent tile (VMEM-hungry); padding + masking would be preferable.
    return dim


# ----------------------------- linear kernel --------------------------------

def _linear_kernel(x_ref, w_ref, b_ref, o_ref, acc_ref):
    k = pl.program_id(2)

    @pl.when(k == 0)
    def _():
        acc_ref[...] = jnp.zeros_like(acc_ref)

    # bf16 MXU inputs (cast once in the wrapper), f32 accumulation.
    acc_ref[...] += jnp.dot(x_ref[...], w_ref[...],
                            preferred_element_type=jnp.float32)

    @pl.when(k == pl.num_programs(2) - 1)
    def _():
        o_ref[...] = (acc_ref[...] + b_ref[...].astype(jnp.float32)).astype(o_ref.dtype)


def linear(x2d, w, b, *, out_dtype=None, tm=256, tn=512, tk=1024):
    """y = x2d @ w + b, tiled & software-pipelined.  x2d:(M,K), w:(K,N), b:(1,N).

    x2d / w are cast to bf16 here (once) so the kernel streams half the bytes."""
    if x2d.dtype != jnp.bfloat16:
        x2d = x2d.astype(jnp.bfloat16)
    if w.dtype != jnp.bfloat16:
        w = w.astype(jnp.bfloat16)
    M, K = x2d.shape
    N = w.shape[1]
    out_dtype = out_dtype or x2d.dtype
    tm = _choose_tile(M, tm, 8)
    tn = _choose_tile(N, tn, 128)
    tk = _choose_tile(K, tk, 128)
    grid = (M // tm, N // tn, K // tk)
    return pl.pallas_call(
        _linear_kernel,
        grid=grid,
        out_shape=jax.ShapeDtypeStruct((M, N), out_dtype),
        in_specs=[
            pl.BlockSpec((tm, tk), lambda i, j, k: (i, k)),
            pl.BlockSpec((tk, tn), lambda i, j, k: (k, j)),
            pl.BlockSpec((1, tn), lambda i, j, k: (0, j)),
        ],
        out_specs=pl.BlockSpec((tm, tn), lambda i, j, k: (i, j)),
        scratch_shapes=[pltpu.VMEM((tm, tn), jnp.float32)],
        compiler_params=pltpu.CompilerParams(
            dimension_semantics=("parallel", "parallel", "arbitrary"),
            vmem_limit_bytes=_VMEM_LIMIT,
        ),
    )(x2d, w, b)


# ----------------------- k-RoPE + v head-split kernel ------------------------
# Produces the present_key_value tensors (k rotated, v) in (B, H, S, D).
# q is NOT handled here -- its RoPE is fused into the flash kernel.

def _rope_kv_kernel(k_ref, v_ref, cos_ref, sin_ref, ko_ref, vo_ref, *, half):
    cos = cos_ref[...]          # (ts, D), float32
    sin_signed = sin_ref[...]   # (ts, D), float32 (rotate_half sign folded in)
    kf = k_ref[...].astype(jnp.float32)
    ko_ref[...] = (kf * cos + pltpu.roll(kf, shift=half, axis=1) * sin_signed
                   ).astype(ko_ref.dtype)
    vo_ref[...] = v_ref[...].astype(vo_ref.dtype)


def rope_kv_split(qkv, n_head, cos, sin_signed, *, out_dtype=jnp.bfloat16, ts=512):
    """qkv: (B, S, 3E) -> (k_rot, v), each (B, H, S, D) in `out_dtype`.

    Reads the k / v column slices of the fused qkv tensor directly through
    BlockSpec index maps.  Grid is (B, S//ts, H) with H fastest so the (ts, D)
    cos/sin blocks stay resident in VMEM across heads (no re-DMA)."""
    B, S, E3 = qkv.shape
    E = E3 // 3
    H = n_head
    D = E // H
    ts = _choose_tile(S, ts, 8)
    grid = (B, S // ts, H)

    # column block `off*H + h` of (B, S, 3E) = head h of {q(0), k(1), v(2)}
    k_spec = pl.BlockSpec((None, ts, D), lambda b, s, h: (b, s, H + h))
    v_spec = pl.BlockSpec((None, ts, D), lambda b, s, h: (b, s, 2 * H + h))
    tab_spec = pl.BlockSpec((ts, D), lambda b, s, h: (s, 0))     # resident over h
    out_spec = pl.BlockSpec((None, None, ts, D), lambda b, s, h: (b, h, s, 0))
    out_sds = jax.ShapeDtypeStruct((B, H, S, D), out_dtype)

    kern = functools.partial(_rope_kv_kernel, half=D // 2)
    return pl.pallas_call(
        kern,
        grid=grid,
        out_shape=(out_sds, out_sds),
        in_specs=[k_spec, v_spec, tab_spec, tab_spec],
        out_specs=(out_spec, out_spec),
        compiler_params=pltpu.CompilerParams(
            dimension_semantics=("parallel", "parallel", "parallel"),
            vmem_limit_bytes=_VMEM_LIMIT,
        ),
    )(qkv, qkv, cos, sin_signed)


# ---------------- flash attention (no mask) with fused q-RoPE ----------------

def _flash_kernel(q_ref, cos_ref, sin_ref, k_ref, v_ref, o_ref,
                  q_sc, m_sc, l_sc, acc_sc, *, scale, half):
    ki = pl.program_id(3)

    @pl.when(ki == 0)
    def _():
        # q RoPE + softmax scale applied ONCE per (b, h, qi) into bf16 scratch.
        qf = q_ref[...].astype(jnp.float32)                       # (tq, D)
        q_rot = qf * cos_ref[...] + pltpu.roll(qf, shift=half, axis=1) * sin_ref[...]
        q_sc[...] = (q_rot * scale).astype(jnp.bfloat16)
        m_sc[...] = jnp.full(m_sc.shape, -jnp.inf, m_sc.dtype)
        l_sc[...] = jnp.zeros_like(l_sc)
        acc_sc[...] = jnp.zeros_like(acc_sc)

    k = k_ref[...].astype(jnp.bfloat16)                           # (tk, D)
    # contract on the head dim of BOTH operands -> no materialized k transpose
    s = lax.dot_general(q_sc[...], k, (((1,), (1,)), ((), ())),
                        preferred_element_type=jnp.float32)       # (tq, tk)

    m_prev = m_sc[...]
    m_new = jnp.maximum(m_prev, jnp.max(s, axis=-1, keepdims=True))
    alpha = jnp.exp(m_prev - m_new)
    p = jnp.exp(s - m_new)
    l_sc[...] = alpha * l_sc[...] + jnp.sum(p, axis=-1, keepdims=True)
    acc_sc[...] = alpha * acc_sc[...] + jnp.dot(
        p.astype(jnp.bfloat16), v_ref[...].astype(jnp.bfloat16),
        preferred_element_type=jnp.float32)
    m_sc[...] = m_new

    @pl.when(ki == pl.num_programs(3) - 1)
    def _():
        inv_l = pl.reciprocal(l_sc[...], approx=True)
        o_ref[...] = (acc_sc[...] * inv_l).astype(o_ref.dtype)


def flash_attention(qkv, k, v, cos, sin_signed, n_head, *,
                    out_dtype=jnp.bfloat16, tq=512, tk=512):
    """qkv: (B, S, 3E) fused activation (q read in-place via index map),
    k, v: (B, H, S, D) (k already rotated).  Returns output in (B, S, E)."""
    B, H, S, D = k.shape
    E = H * D
    tq = _choose_tile(S, tq, 8)
    tk = _choose_tile(S, tk, 8)
    scale = 1.0 / math.sqrt(D)
    grid = (B, H, S // tq, S // tk)

    # head h of q lives in column block h of the (B, S, 3E) qkv activation
    q_spec = pl.BlockSpec((None, tq, D), lambda b, h, qi, ki: (b, qi, h))
    tab_spec = pl.BlockSpec((tq, D), lambda b, h, qi, ki: (qi, 0))  # resident over ki
    kv_spec = pl.BlockSpec((None, None, tk, D), lambda b, h, qi, ki: (b, h, ki, 0))
    # head h owns columns [h*D, (h+1)*D) of (B, S, E) -> merge-heads is free.
    # TODO(synk): if head_size < 128, group heads per grid step to keep output
    # stores lane-dense (vst vs vst.msk).
    o_spec = pl.BlockSpec((None, tq, D), lambda b, h, qi, ki: (b, qi, h))

    kern = functools.partial(_flash_kernel, scale=scale, half=D // 2)
    return pl.pallas_call(
        kern,
        grid=grid,
        out_shape=jax.ShapeDtypeStruct((B, S, E), out_dtype),
        in_specs=[q_spec, tab_spec, tab_spec, kv_spec, kv_spec],
        out_specs=o_spec,
        scratch_shapes=[
            pltpu.VMEM((tq, D), jnp.bfloat16),  # rotated+scaled q (resident over ki)
            pltpu.VMEM((tq, 1), jnp.float32),   # running max
            pltpu.VMEM((tq, 1), jnp.float32),   # running denom
            pltpu.VMEM((tq, D), jnp.float32),   # running accumulator
        ],
        compiler_params=pltpu.CompilerParams(
            dimension_semantics=("parallel", "parallel", "parallel", "arbitrary"),
            vmem_limit_bytes=_VMEM_LIMIT,
        ),
    )(qkv, cos, sin_signed, k, v)


# ------------------------------ RoPE tables ----------------------------------

@functools.lru_cache(maxsize=8)
def rope_tables(seq_len, head_size, base=10000.0):
    """float32 cos / sign-folded-sin tables of shape (S, D) (cached)."""
    half = head_size // 2
    inv_freq = 1.0 / (base ** (jnp.arange(half, dtype=jnp.float32) / half))
    pos = jnp.arange(seq_len, dtype=jnp.float32)
    ang = pos[:, None] * inv_freq[None, :]                        # (S, half)
    cos = jnp.concatenate([jnp.cos(ang), jnp.cos(ang)], axis=-1)  # (S, D)
    sin = jnp.concatenate([jnp.sin(ang), jnp.sin(ang)], axis=-1)  # (S, D)
    sign = jnp.concatenate([-jnp.ones(half), jnp.ones(half)])
    return cos.astype(jnp.float32), (sin * sign[None, :]).astype(jnp.float32)


# ------------------------------ full forward ---------------------------------

def llada_attention_forward(x, params, n_head, *, cache_dtype=jnp.bfloat16):
    B, S, E = x.shape
    D = E // n_head

    # fused qkv projection (tiled matmul, bf16 inputs cast once, bf16 activation)
    qkv = linear(x.reshape(B * S, E), params["w_attn"], params["b_attn"],
                 out_dtype=jnp.bfloat16)
    qkv = qkv.reshape(B, S, 3 * E)

    # k-RoPE + v head-split -> present_key_value tensors (B, H, S, D)
    cos, sin_signed = rope_tables(S, D)
    k_rot, v_h = rope_kv_split(qkv, n_head, cos, sin_signed, out_dtype=cache_dtype)

    # bidirectional flash attention with fused q-RoPE+scale; output in (B, S, E)
    y = flash_attention(qkv, k_rot, v_h, cos, sin_signed, n_head,
                        out_dtype=jnp.bfloat16)

    # output projection (tiled matmul), back to the input dtype
    y = linear(y.reshape(B * S, E), params["w_proj"], params["b_proj"],
               out_dtype=x.dtype).reshape(B, S, E)
    # TODO(synk): attn_dropout / resid_dropout omitted (eval mode, dropout_p=0.0);
    # attn_mask / past_key_value / kv-cache concat paths not implemented (None here).
    return y, (k_rot, v_h)


# ----------------------------- pure-JAX reference ----------------------------

def _reference(x, params, n_head):
    hp = jax.lax.Precision.HIGHEST
    B, S, E = x.shape
    D = E // n_head
    qkv = jnp.dot(x, params["w_attn"], precision=hp) + params["b_attn"]
    q, k, v = jnp.split(qkv, 3, axis=-1)

    def to_heads(t):
        return t.reshape(B, S, n_head, D).transpose(0, 2, 1, 3)

    q, k, v = to_heads(q), to_heads(k), to_heads(v)
    cos, sin_signed = rope_tables(S, D)
    half = D // 2

    def rope(t):
        t1, t2 = t[..., :half], t[..., half:]
        rot = jnp.concatenate([t2, t1], axis=-1)  # roll by half
        return t * cos + rot * sin_signed

    q, k = rope(q), rope(k)
    s = jnp.einsum("bhqd,bhkd->bhqk", q, k, precision=hp) / math.sqrt(D)
    p = jax.nn.softmax(s, axis=-1)
    y = jnp.einsum("bhqk,bhkd->bhqd", p, v, precision=hp)
    y = y.transpose(0, 2, 1, 3).reshape(B, S, E)
    y = jnp.dot(y, params["w_proj"], precision=hp) + params["b_proj"]
    return y, (k, v)


# ---------------------------------- main --------------------------------------

if __name__ == "__main__":
    # small config: batch=2, seq=8, n_head=2, n_embd=256 (head_size=128, lane-aligned)
    B, S, n_head, n_embd = 2, 8, 2, 256

    key = jax.random.PRNGKey(0)
    k1, k2, k3, _ = jax.random.split(key, 4)
    params = {
        "w_attn": 0.02 * jax.random.normal(k1, (n_embd, 3 * n_embd), jnp.float32),
        "b_attn": jnp.zeros((1, 3 * n_embd), jnp.float32),
        "w_proj": 0.02 * jax.random.normal(k2, (n_embd, n_embd), jnp.float32),
        "b_proj": jnp.zeros((1, n_embd), jnp.float32),
    }
    x = jax.random.normal(k3, (B, S, n_embd), jnp.float32)

    y, (k_present, v_present) = llada_attention_forward(x, params, n_head)
    jax.block_until_ready((y, k_present, v_present))

    y_ref, (k_expect, v_expect) = _reference(x, params, n_head)
    assert jnp.allclose(y, y_ref, atol=2e-2, rtol=2e-2), "output mismatch"
    assert jnp.allclose(k_present.astype(jnp.float32), k_expect,
                        atol=2e-2, rtol=2e-2), "k cache mismatch"
    assert jnp.allclose(v_present.astype(jnp.float32), v_expect,
                        atol=2e-2, rtol=2e-2), "v cache mismatch"

    print("KERNEL_OK")
</pallas_src>

<mosaic_0001>
module attributes {stable_mosaic.version = 11 : i64} {
  func.func @_linear_kernel(%arg0: i32, %arg1: i32, %arg2: i32, %arg3: memref<16x256xbf16, #tpu.memory_space<vmem>>, %arg4: memref<256x384xbf16, #tpu.memory_space<vmem>>, %arg5: memref<1x384xf32, #tpu.memory_space<vmem>>, %arg6: memref<16x384xbf16, #tpu.memory_space<vmem>>, %arg7: memref<16x384xf32, #tpu.memory_space<vmem>>) attributes {dimension_semantics = [#tpu.dimension_semantics<parallel>, #tpu.dimension_semantics<parallel>, #tpu.dimension_semantics<arbitrary>], iteration_bounds = array<i64: 1, 2, 1>, scalar_prefetch = 0 : i64, scratch_operands = 1 : i64, tpu.core_type = #tpu.core_type<tc>, window_params = [{transform_indices = @transform_0, window_bounds = array<i64: 16, 256>}, {transform_indices = @transform_1, window_bounds = array<i64: 256, 384>}, {transform_indices = @transform_2, window_bounds = array<i64: 1, 384>}, {transform_indices = @transform_3, window_bounds = array<i64: 16, 384>}]} {
    %c0_i32 = arith.constant 0 : i32
    %0 = arith.cmpi eq, %arg2, %c0_i32 : i32
    %1 = arith.extui %0 : i1 to i32
    %c0_i32_0 = arith.constant 0 : i32
    %2 = arith.cmpi ne, %1, %c0_i32_0 : i32
    scf.if %2 {
      %cst_10 = arith.constant 0.000000e+00 : f32
      %12 = vector.broadcast %cst_10 : f32 to vector<16x384xf32>
      %c0_11 = arith.constant 0 : index
      %c0_12 = arith.constant 0 : index
      %13 = vector.load %arg7[%c0_11, %c0_12] : memref<16x384xf32, #tpu.memory_space<vmem>>, vector<16x384xf32>
      tpu.vector_store %arg7[%c0_11, %c0_12], %12 {strides = array<i32>} : memref<16x384xf32, #tpu.memory_space<vmem>>, vector<16x384xf32>,
    } else {
    }
    %c0 = arith.constant 0 : index
    %c0_1 = arith.constant 0 : index
    %3 = vector.load %arg7[%c0, %c0_1] : memref<16x384xf32, #tpu.memory_space<vmem>>, vector<16x384xf32>
    %c0_2 = arith.constant 0 : index
    %c0_3 = arith.constant 0 : index
    %4 = vector.load %arg3[%c0_2, %c0_3] : memref<16x256xbf16, #tpu.memory_space<vmem>>, vector<16x256xbf16>
    %c0_4 = arith.constant 0 : index
    %c0_5 = arith.constant 0 : index
    %5 = vector.load %arg4[%c0_4, %c0_5] : memref<256x384xbf16, #tpu.memory_space<vmem>>, vector<256x384xbf16>
    %cst = arith.constant dense<0.000000e+00> : vector<16x384xf32>
    %6 = tpu.matmul %4, %5, %cst {dimension_numbers = #tpu.dot_dimension_numbers<[1], [0], [0], [1], [0, 0, 1, 1], [], []>} : vector<16x256xbf16>, vector<256x384xbf16>, vector<16x384xf32> -> vector<16x384xf32>
    %7 = arith.addf %3, %6 : vector<16x384xf32>
    %c0_6 = arith.constant 0 : index
    %c0_7 = arith.constant 0 : index
    %8 = vector.load %arg7[%c0_6, %c0_7] : memref<16x384xf32, #tpu.memory_space<vmem>>, vector<16x384xf32>
    tpu.vector_store %arg7[%c0_6, %c0_7], %7 {strides = array<i32>} : memref<16x384xf32, #tpu.memory_space<vmem>>, vector<16x384xf32>,
    %c0_i32_8 = arith.constant 0 : i32
    %9 = arith.cmpi eq, %arg2, %c0_i32_8 : i32
    %10 = arith.extui %9 : i1 to i32
    %c0_i32_9 = arith.constant 0 : i32
    %11 = arith.cmpi ne, %10, %c0_i32_9 : i32
    scf.if %11 {
      %c0_10 = arith.constant 0 : index
      %c0_11 = arith.constant 0 : index
      %12 = vector.load %arg7[%c0_10, %c0_11] : memref<16x384xf32, #tpu.memory_space<vmem>>, vector<16x384xf32>
      %c0_12 = arith.constant 0 : index
      %c0_13 = arith.constant 0 : index
      %13 = vector.load %arg5[%c0_12, %c0_13] : memref<1x384xf32, #tpu.memory_space<vmem>>, vector<1x384xf32>
      %14 = vector.broadcast %13 : vector<1x384xf32> to vector<16x384xf32>
      %15 = arith.addf %12, %14 : vector<16x384xf32>
      %16 = arith.truncf %15 : vector<16x384xf32> to vector<16x384xbf16>
      %c0_14 = arith.constant 0 : index
      %c0_15 = arith.constant 0 : index
      %17 = vector.load %arg6[%c0_14, %c0_15] : memref<16x384xbf16, #tpu.memory_space<vmem>>, vector<16x384xbf16>
      tpu.vector_store %arg6[%c0_14, %c0_15], %16 {strides = array<i32>} : memref<16x384xbf16, #tpu.memory_space<vmem>>, vector<16x384xbf16>,
    } else {
    }
    return
  }
  func.func @transform_0(%arg0: i32, %arg1: i32, %arg2: i32) -> (i32, i32) {
    %c0_i32 = arith.constant 0 : i32
    return %arg0, %arg2 : i32, i32
  }
  func.func @transform_1(%arg0: i32, %arg1: i32, %arg2: i32) -> (i32, i32) {
    %c0_i32 = arith.constant 0 : i32
    return %arg2, %arg1 : i32, i32
  }
  func.func @transform_2(%arg0: i32, %arg1: i32, %arg2: i32) -> (i32, i32) {
    %c0_i32 = arith.constant 0 : i32
    %c0_i32_0 = arith.constant 0 : i32
    return %c0_i32, %arg1 : i32, i32
  }
  func.func @transform_3(%arg0: i32, %arg1: i32, %arg2: i32) -> (i32, i32) {
    %c0_i32 = arith.constant 0 : i32
    return %arg0, %arg1 : i32, i32
  }
}

</mosaic_0001>

<llo_original>
// kernel: tpu_custom_call.1
$region0: #{tpu_custom_call.1}
  #allocation0 [shape = 'u32[]', space=smem, size = 0x4, offset = 0x4, fixed_abs, tag = 'smem constant byte address 0x4 - core index']
  #allocation1 [shape = 'u32[144,128]{1,0:T(1,128)}', space=vmem, size = 0x12000, scoped, tag = 'internal scratch']
  #allocation2 [shape = 'f32[16,384]{1,0:T(8,128)}', space=vmem, size = 0x6000, scoped, tag = 'scratch operand']
  %s0 = inlined_call_operand.hbm [shape: bf16[16,256], index: 0, kind: input, shape index: {}]
  %s1 = inlined_call_operand.hbm [shape: bf16[256,768], index: 1, kind: input, shape index: {}]
  %s2 = inlined_call_operand.hbm [shape: f32[1,768], index: 2, kind: input, shape index: {}]
  %s3 = inlined_call_operand.hbm [shape: bf16[16,768], index: 3, kind: output, shape index: {}]
  %s4 = sld [smem:[#allocation0]]
  $region65: #{tpu_custom_call.1} parent=0
    _
  %s6 = ssub.s32 1, %s4
  %s7 = scalar_select 0, %s6, %s4
  $region1: #{tpu_custom_call.1} parent=0
    #allocation3 [shape = 'u8[8192]{0}', space=vmem, size = 0x2000, scoped, tag = 'input window, operand 0, single buffered']
    #allocation4 [shape = 's32[2]{0}', space=sflag, size = 0x8, scoped, tag = 'scoped memory for tpu_custom_call.1']
    #allocation5 [shape = 's32[2]{0}', space=sflag, size = 0x8, scoped, tag = 'scoped memory for tpu_custom_call.1']
    #allocation6 [shape = 'u8[393216]{0}', space=vmem, size = 0x60000, scoped, tag = 'input window, operand 1']
    #allocation7 [shape = 's32[2]{0}', space=sflag, size = 0x8, scoped, tag = 'scoped memory for tpu_custom_call.1']
    #allocation8 [shape = 'u8[3072]{0}', space=vmem, size = 0xc00, scoped, tag = 'input window, operand 2']
    #allocation9 [shape = 'u8[24576]{0}', space=vmem, size = 0x6000, scoped, tag = 'output window, operand 0']
    %8 = vsyncpa [#allocation4], 0
    %9 = vsyncpa [#allocation7], 0
    %s10 = scalar_lea.sflag [#allocation7], 1
    %11 = vsyncpa %s10, 0
    %12 = vsyncpa [#allocation5], 0
    %s13 = scalar_lea.sflag [#allocation5], 1
    %14 = vsyncpa %s13, 0
    loop: start=0, step=1, limit=4
    $region2: #{tpu_custom_call.1} parent=1 // loop_pre_header
      _
    $region3: #{tpu_custom_call.1} parent=1 // loop_header
      %s16 = sphi 0, %s20
      %p17 = scmp.ge.s32.totalorder %s16, 4
      %s23 = sphi 0, %s42
      %s24 = sphi 0, %s38
      %s25 = sphi 0, %s34
      %s26 = sphi 0, %s23
      %s27 = sphi 0, %s24
      %s28 = sphi 0, %s25
      %s29 = sphi 0, %s26
      %s30 = sphi 0, %s27
      %s31 = sphi 0, %s28
      %s47 = sphi 0, %s49
      %s50 = sphi 0, %s47
      %s51 = sphi 0, %s50
      %s67 = sphi 0, %s51
      %s75 = sphi 0, %s77
      %s78 = sphi 0, %s75
      %s79 = sphi 0, %s78
      %s95 = sphi 0, %s79
      %s101 = sphi 0, %s103
      %s104 = sphi 0, %s101
      %s105 = sphi 0, %s104
      %s121 = sphi 0, %s105
      %s129 = sphi 0, %s131
      %s132 = sphi 0, %s129
      %s133 = sphi 0, %s132
      %s149 = sphi 0, %s133
    $region4: #{tpu_custom_call.1} parent=1 // loop_header_branch
      %19 = sbr.rel (%p17) target = $region8
    $region5: #{tpu_custom_call.1} parent=1 // loop_body
      %s21 = ssub.s32 %s16, 1
      %s22 = ssub.s32 %s16, 2
      %s32 = sadd.s32 1, %s25
      %p33 = scmp.ge.s32.totalorder %s32, 1
      %s34 = scalar_select %p33, 0, %s32
      %s35 = sadd.s32 1, %s24
      %s36 = scalar_select %p33, %s35, %s24
      %p37 = scmp.ge.s32.totalorder %s36, 2
      %s38 = scalar_select %p37, 0, %s36
      %s39 = sadd.s32 1, %s23
      %s40 = scalar_select %p37, %s39, %s23
      %p41 = scmp.ge.s32.totalorder %s40, 1
      %s42 = scalar_select %p41, 0, %s40
      %s43 = ssub.s32 %s23, %s42
      %s44 = ssub.s32 %s25, %s34
      %s45 = sor.u32 %s43, %s44
      %p46 = scmp.eq.s32.totalorder %s45, 0
      %s48 = sadd.s32 %s47, 1
      %s49 = scalar_select %p46, %s47, %s48
      %p52 = pneg %p46
      %p53 = scmp.eq.s32.totalorder %s16, 1
      %p54 = por %p52, %p53
      %p55 = scmp.ne.s32.totalorder %s47, %s50
      %p56 = scmp.eq.s32.totalorder %s16, 0
      %p57 = por %p55, %p56
      %p58 = scmp.ne.s32.totalorder %s47, %s50
      %p59 = scmp.eq.s32.totalorder %s21, 1
      %p60 = por %p58, %p59
      %p61 = scmp.ne.s32.totalorder %s50, %s51
      %p62 = scmp.eq.s32.totalorder %s21, 0
      %p63 = por %p61, %p62
      %p64 = scmp.ne.s32.totalorder %s50, %s51
      %p65 = scmp.eq.s32.totalorder %s22, 1
      %p66 = por %p64, %p65
      %p68 = scmp.ne.s32.totalorder %s51, %s67
      %p69 = scmp.eq.s32.totalorder %s22, 0
      %p70 = por %p68, %p69
      %s71 = ssub.s32 %s25, %s34
      %s72 = ssub.s32 %s24, %s38
      %s73 = sor.u32 %s71, %s72
      %p74 = scmp.eq.s32.totalorder %s73, 0
      %s76 = sadd.s32 %s75, 1
      %s77 = scalar_select %p74, %s75, %s76
      %p80 = pneg %p74
      %p81 = scmp.eq.s32.totalorder %s16, 1
      %p82 = por %p80, %p81
      %p83 = scmp.ne.s32.totalorder %s75, %s78
      %p84 = scmp.eq.s32.totalorder %s16, 0
      %p85 = por %p83, %p84
      %p86 = scmp.ne.s32.totalorder %s75, %s78
      %p87 = scmp.eq.s32.totalorder %s21, 1
      %p88 = por %p86, %p87
      %p89 = scmp.ne.s32.totalorder %s78, %s79
      %p90 = scmp.eq.s32.totalorder %s21, 0
      %p91 = por %p89, %p90
      %p92 = scmp.ne.s32.totalorder %s78, %s79
      %p93 = scmp.eq.s32.totalorder %s22, 1
      %p94 = por %p92, %p93
      %p96 = scmp.ne.s32.totalorder %s79, %s95
      %p97 = scmp.eq.s32.totalorder %s22, 0
      %p98 = por %p96, %p97
      %s99 = ssub.s32 %s24, %s38
      %p100 = scmp.eq.s32.totalorder %s99, 0
      %s102 = sadd.s32 %s101, 1
      %s103 = scalar_select %p100, %s101, %s102
      %p106 = pneg %p100
      %p107 = scmp.eq.s32.totalorder %s16, 1
      %p108 = por %p106, %p107
      %p109 = scmp.ne.s32.totalorder %s101, %s104
      %p110 = scmp.eq.s32.totalorder %s16, 0
      %p111 = por %p109, %p110
      %p112 = scmp.ne.s32.totalorder %s101, %s104
      %p113 = scmp.eq.s32.totalorder %s21, 1
      %p114 = por %p112, %p113
      %p115 = scmp.ne.s32.totalorder %s104, %s105
      %p116 = scmp.eq.s32.totalorder %s21, 0
      %p117 = por %p115, %p116
      %p118 = scmp.ne.s32.totalorder %s104, %s105
      %p119 = scmp.eq.s32.totalorder %s22, 1
      %p120 = por %p118, %p119
      %p122 = scmp.ne.s32.totalorder %s105, %s121
      %p123 = scmp.eq.s32.totalorder %s22, 0
      %p124 = por %p122, %p123
      %s125 = ssub.s32 %s23, %s42
      %s126 = ssub.s32 %s24, %s38
      %s127 = sor.u32 %s125, %s126
      %p128 = scmp.eq.s32.totalorder %s127, 0
      %s130 = sadd.s32 %s129, 1
      %s131 = scalar_select %p128, %s129, %s130
      %p134 = pneg %p128
      %p135 = scmp.eq.s32.totalorder %s16, 1
      %p136 = por %p134, %p135
      %p137 = scmp.ne.s32.totalorder %s129, %s132
      %p138 = scmp.eq.s32.totalorder %s16, 0
      %p139 = por %p137, %p138
      %p140 = scmp.ne.s32.totalorder %s129, %s132
      %p141 = scmp.eq.s32.totalorder %s21, 1
      %p142 = por %p140, %p141
      %p143 = scmp.ne.s32.totalorder %s132, %s133
      %p144 = scmp.eq.s32.totalorder %s21, 0
      %p145 = por %p143, %p144
      %p146 = scmp.ne.s32.totalorder %s132, %s133
      %p147 = scmp.eq.s32.totalorder %s22, 1
      %p148 = por %p146, %p147
      %p150 = scmp.ne.s32.totalorder %s133, %s149
      %p151 = scmp.eq.s32.totalorder %s22, 0
      %p152 = por %p150, %p151
      %p153 = scmp.le.s32.totalorder 1, %s16
      %p154 = scmp.lt.s32.totalorder %s16, 3
      %p155 = pnand %p153, %p154
      %p156 = pneg %p155
      // Predicated region
      $region9: #{tpu_custom_call.1} parent=5 // pred_check
        _
      $region10: #{tpu_custom_call.1} parent=5 // pred_check_branch
        %158 = sbr.rel (%p155) target = $region12
      $region11: #{tpu_custom_call.1} parent=5 // pred_region
        %s159 = ssub.s32 %s16, 1
        // Predicated region
        $region13: #{tpu_custom_call.1} parent=11 // pred_check
          %p160 = pneg %p63
        $region14: #{tpu_custom_call.1} parent=11 // pred_check_branch
          %162 = sbr.rel (%p160) target = $region16
        $region15: #{tpu_custom_call.1} parent=11 // pred_region
          %s163 = smul.u32 2, %s26
          %s164 = smul.u32 2, %s28
          %s166 = ssub.s32 256, 256
          %167 = vsyncadd [#allocation4], %s166
          %s168 = smul.addr %s163, 2
          %s169 = sadd.s32 %s164, %s168
          %s170 = smul.addr %s169, 64
          %s171 = scalar_lea.hbm %s0, %s170
          %s172 = sshll.u32 [#allocation3], 4
          %s173 = int_to_ptr.vmem [resolvable:$true] %s172
          %178 = dma.hbm_to_vmem [thread:$0]  %s171, 256, %s173, [#allocation4], 128, 128, 8
        $region16: #{tpu_custom_call.1} parent=11 // pred_fallthru
          _
      $region12: #{tpu_custom_call.1} parent=5 // pred_fallthru
        _
      %p179 = scmp.lt.s32.totalorder %s16, 2
      // Predicated region
      $region17: #{tpu_custom_call.1} parent=5 // pred_check
        %p180 = pneg %p179
      $region18: #{tpu_custom_call.1} parent=5 // pred_check_branch
        %182 = sbr.rel (%p180) target = $region20
      $region19: #{tpu_custom_call.1} parent=5 // pred_region
        // Predicated region
        $region21: #{tpu_custom_call.1} parent=19 // pred_check
          %p183 = pneg %p85
        $region22: #{tpu_custom_call.1} parent=19 // pred_check_branch
          %185 = sbr.rel (%p183) target = $region24
        $region23: #{tpu_custom_call.1} parent=19 // pred_region
          %s186 = sand.u32 %s16, 1
          %s187 = scalar_lea.sflag [#allocation7], %s186
          %s188 = sand.u32 %s75, 1
          %s189 = smul.addr %s188, 384
          %s190 = scalar_lea.vmem [#allocation6], %s189
          %s191 = smul.u32 32, %s25
          %s192 = smul.u32 3, %s24
          %s194 = ssub.s32 6144, 6144
          %195 = vsyncadd %s187, %s194
          %s196 = smul.addr %s191, 6
          %s197 = sadd.s32 %s192, %s196
          %s198 = smul.addr %s197, 64
          %s199 = scalar_lea.hbm %s1, %s198
          %s200 = sshll.u32 %s190, 4
          %s201 = int_to_ptr.vmem [resolvable:$true] %s200
          %206 = dma.hbm_to_vmem [thread:$0]  %s199, 6144, %s201, %s187, 384, 192, 12
        $region24: #{tpu_custom_call.1} parent=19 // pred_fallthru
          _
        // Predicated region
        $region25: #{tpu_custom_call.1} parent=19 // pred_check
          %p207 = pneg %p111
        $region26: #{tpu_custom_call.1} parent=19 // pred_check_branch
          %209 = sbr.rel (%p207) target = $region28
        $region27: #{tpu_custom_call.1} parent=19 // pred_region
          %s210 = sand.u32 %s16, 1
          %s211 = scalar_lea.sflag [#allocation7], %s210
          %s212 = sand.u32 %s101, 1
          %s213 = smul.addr %s212, 3
          %s214 = scalar_lea.vmem [#allocation8], %s213
          %s215 = smul.u32 3, %s24
          %s217 = ssub.s32 48, 48
          %218 = vsyncadd %s211, %s217
          %s219 = smul.addr %s215, 16
          %s220 = scalar_lea.hbm %s2, %s219
          %s222 = sshll.u32 %s214, 4
          %s223 = int_to_ptr.vmem [resolvable:$true] %s222
          %225 = dma.hbm_to_vmem [thread:$0]  %s220, 48, %s223, %s211
        $region28: #{tpu_custom_call.1} parent=19 // pred_fallthru
          _
      $region20: #{tpu_custom_call.1} parent=5 // pred_fallthru
        _
      %p226 = scmp.le.s32.totalorder 1, %s16
      %p227 = scmp.lt.s32.totalorder %s16, 3
      %p228 = pnand %p226, %p227
      %p229 = pneg %p228
      // Predicated region
      $region29: #{tpu_custom_call.1} parent=5 // pred_check
        _
      $region30: #{tpu_custom_call.1} parent=5 // pred_check_branch
        %231 = sbr.rel (%p228) target = $region32
      $region31: #{tpu_custom_call.1} parent=5 // pred_region
        %s232 = ssub.s32 %s16, 1
        // Predicated region
        $region33: #{tpu_custom_call.1} parent=31 // pred_check
          %p233 = pneg %p63
        $region34: #{tpu_custom_call.1} parent=31 // pred_check_branch
          %235 = sbr.rel (%p233) target = $region36
        $region35: #{tpu_custom_call.1} parent=31 // pred_region
          %236 = dma.done [#allocation4], 256
        $region36: #{tpu_custom_call.1} parent=31 // pred_fallthru
          _
        %s237 = sand.u32 %s21, 1
        %s238 = scalar_lea.sflag [#allocation7], %s237
        %s239 = sand.u32 %s78, 1
        %s240 = smul.addr %s239, 384
        %s241 = scalar_lea.vmem [#allocation6], %s240
        // Predicated region
        $region37: #{tpu_custom_call.1} parent=31 // pred_check
          %p242 = pneg %p91
        $region38: #{tpu_custom_call.1} parent=31 // pred_check_branch
          %244 = sbr.rel (%p242) target = $region40
        $region39: #{tpu_custom_call.1} parent=31 // pred_region
          %245 = dma.done %s238, 6144
        $region40: #{tpu_custom_call.1} parent=31 // pred_fallthru
          _
        %s246 = sand.u32 %s21, 1
        %s247 = scalar_lea.sflag [#allocation7], %s246
        %s248 = sand.u32 %s104, 1
        %s249 = smul.addr %s248, 3
        %s250 = scalar_lea.vmem [#allocation8], %s249
        // Predicated region
        $region41: #{tpu_custom_call.1} parent=31 // pred_check
          %p251 = pneg %p117
        $region42: #{tpu_custom_call.1} parent=31 // pred_check_branch
          %253 = sbr.rel (%p251) target = $region44
        $region43: #{tpu_custom_call.1} parent=31 // pred_region
          %254 = dma.done %s247, 48
        $region44: #{tpu_custom_call.1} parent=31 // pred_fallthru
          _
        %p255 = pneg %p63
        %p256 = pneg %p60
        %s257 = sand.u32 %s21, 1
        %s258 = scalar_lea.sflag [#allocation7], %s257
        %s259 = sand.u32 %s78, 1
        %s260 = smul.addr %s259, 384
        %s261 = scalar_lea.vmem [#allocation6], %s260
        %p262 = pneg %p91
        %p263 = pneg %p88
        %s264 = sand.u32 %s21, 1
        %s265 = scalar_lea.sflag [#allocation7], %s264
        %s266 = sand.u32 %s104, 1
        %s267 = smul.addr %s266, 3
        %s268 = scalar_lea.vmem [#allocation8], %s267
        %p269 = pneg %p117
        %p270 = pneg %p114
        %p271 = pneg %p145
        %p272 = pneg %p142
        %s273 = sand.u32 %s132, 1
        %s274 = scalar_lea.sflag [#allocation5], %s273
        %s275 = sand.u32 %s132, 1
        %s276 = smul.addr %s275, 24
        %s277 = scalar_lea.vmem [#allocation9], %s276
        %s278 = smul.u32 2, %s26
        %s279 = smul.u32 2, %s28
        %s280 = smul.u32 32, %s28
        %s281 = smul.u32 3, %s27
        %s282 = smul.u32 3, %s27
        %s283 = smul.u32 2, %s26
        %s284 = smul.u32 3, %s27
        %p286 = scmp.eq.s32.totalorder %s28, 0
        // Predicated region
        $region45: #{tpu_custom_call.1} parent=31 // pred_check
          %p287 = pneg %p286
        $region46: #{tpu_custom_call.1} parent=31 // pred_check_branch
          %289 = sbr.rel (%p287) target = $region48
        $region47: #{tpu_custom_call.1} parent=31 // pred_region
          %290 = vst [vmem:[#allocation2] sm:$0xff] 0.0
          %291 = vst [vmem:[#allocation2 + $0x8] sm:$0xff] 0.0
          %292 = vst [vmem:[#allocation2 + $0x10] sm:$0xff] 0.0
          %293 = vst [vmem:[#allocation2 + $0x18] sm:$0xff] 0.0
          %294 = vst [vmem:[#allocation2 + $0x20] sm:$0xff] 0.0
          %295 = vst [vmem:[#allocation2 + $0x28] sm:$0xff] 0.0
        $region48: #{tpu_custom_call.1} parent=31 // pred_fallthru
          _
        %v296 = vld [vmem:[#allocation2] sm:$0xff]
        %v297 = vld [vmem:[#allocation2 + $0x8] sm:$0xff]
        %v298 = vld [vmem:[#allocation2 + $0x10] sm:$0xff]
        %v299 = vld [vmem:[#allocation2 + $0x18] sm:$0xff]
        %v300 = vld [vmem:[#allocation2 + $0x20] sm:$0xff]
        %v301 = vld [vmem:[#allocation2 + $0x28] sm:$0xff]
        %v302 = vld [vmem:[#allocation3] sm:$0xff]
        %v303 = vld [vmem:[#allocation3 + $0x8] sm:$0xff]
        %v304 = vld [vmem:[%s241] sm:$0xff]
        %v305 = vld [vmem:[%s241 + $0x8] sm:$0xf]
        %v306 = vld [vmem:[%s241 + $0xc] sm:$0xff]
        %v307 = vld [vmem:[%s241 + $0x14] sm:$0xf]
        %v308 = vld [vmem:[%s241 + $0x18] sm:$0xff]
        %v309 = vld [vmem:[%s241 + $0x20] sm:$0xf]
        %v310 = vld [vmem:[%s241 + $0x24] sm:$0xff]
        %v311 = vld [vmem:[%s241 + $0x2c] sm:$0xf]
        %v312 = vld [vmem:[%s241 + $0x30] sm:$0xff]
        %v313 = vld [vmem:[%s241 + $0x38] sm:$0xf]
        %v314 = vld [vmem:[%s241 + $0x3c] sm:$0xff]
        %v315 = vld [vmem:[%s241 + $0x44] sm:$0xf]
        %v316 = vld [vmem:[%s241 + $0x48] sm:$0xff]
        %v317 = vld [vmem:[%s241 + $0x50] sm:$0xf]
        %v318 = vld [vmem:[%s241 + $0x54] sm:$0xff]
        %v319 = vld [vmem:[%s241 + $0x5c] sm:$0xf]
        %v320 = vld [vmem:[%s241 + $0x60] sm:$0xff]
        %v321 = vld [vmem:[%s241 + $0x68] sm:$0xf]
        %v322 = vld [vmem:[%s241 + $0x6c] sm:$0xff]
        %v323 = vld [vmem:[%s241 + $0x74] sm:$0xf]
        %v324 = vld [vmem:[%s241 + $0x78] sm:$0xff]
        %v325 = vld [vmem:[%s241 + $0x80] sm:$0xf]
        %v326 = vld [vmem:[%s241 + $0x84] sm:$0xff]
        %v327 = vld [vmem:[%s241 + $0x8c] sm:$0xf]
        %v328 = vld [vmem:[%s241 + $0x90] sm:$0xff]
        %v329 = vld [vmem:[%s241 + $0x98] sm:$0xf]
        %v330 = vld [vmem:[%s241 + $0x9c] sm:$0xff]
        %v331 = vld [vmem:[%s241 + $0xa4] sm:$0xf]
        %v332 = vld [vmem:[%s241 + $0xa8] sm:$0xff]
        %v333 = vld [vmem:[%s241 + $0xb0] sm:$0xf]
        %v334 = vld [vmem:[%s241 + $0xb4] sm:$0xff]
        %v335 = vld [vmem:[%s241 + $0xbc] sm:$0xf]
        %v336 = vld [vmem:[%s241 + $0xc0] sm:$0xff]
        %v337 = vld [vmem:[%s241 + $0xc8] sm:$0xf]
        %v338 = vld [vmem:[%s241 + $0xcc] sm:$0xff]
        %v339 = vld [vmem:[%s241 + $0xd4] sm:$0xf]
        %v340 = vld [vmem:[%s241 + $0xd8] sm:$0xff]
        %v341 = vld [vmem:[%s241 + $0xe0] sm:$0xf]
        %v342 = vld [vmem:[%s241 + $0xe4] sm:$0xff]
        %v343 = vld [vmem:[%s241 + $0xec] sm:$0xf]
        %v344 = vld [vmem:[%s241 + $0xf0] sm:$0xff]
        %v345 = vld [vmem:[%s241 + $0xf8] sm:$0xf]
        %v346 = vld [vmem:[%s241 + $0xfc] sm:$0xff]
        %v347 = vld [vmem:[%s241 + $0x104] sm:$0xf]
        %v348 = vld [vmem:[%s241 + $0x108] sm:$0xff]
        %v349 = vld [vmem:[%s241 + $0x110] sm:$0xf]
        %v350 = vld [vmem:[%s241 + $0x114] sm:$0xff]
        %v351 = vld [vmem:[%s241 + $0x11c] sm:$0xf]
        %v352 = vld [vmem:[%s241 + $0x120] sm:$0xff]
        %v353 = vld [vmem:[%s241 + $0x128] sm:$0xf]
        %v354 = vld [vmem:[%s241 + $0x12c] sm:$0xff]
        %v355 = vld [vmem:[%s241 + $0x134] sm:$0xf]
        %v356 = vld [vmem:[%s241 + $0x138] sm:$0xff]
        %v357 = vld [vmem:[%s241 + $0x140] sm:$0xf]
        %v358 = vld [vmem:[%s241 + $0x144] sm:$0xff]
        %v359 = vld [vmem:[%s241 + $0x14c] sm:$0xf]
        %v360 = vld [vmem:[%s241 + $0x150] sm:$0xff]
        %v361 = vld [vmem:[%s241 + $0x158] sm:$0xf]
        %v362 = vld [vmem:[%s241 + $0x15c] sm:$0xff]
        %v363 = vld [vmem:[%s241 + $0x164] sm:$0xf]
        %v364 = vld [vmem:[%s241 + $0x168] sm:$0xff]
        %v365 = vld [vmem:[%s241 + $0x170] sm:$0xf]
        %v366 = vld [vmem:[%s241 + $0x174] sm:$0xff]
        %v367 = vld [vmem:[%s241 + $0x17c] sm:$0xf]
        %v370 = vunpack.c.l.b16 %v302
        %v371 = vunpack.c.h.b16 %v302
        %v372 = vunpack.c.l.b16 %v303
        %v373 = vunpack.c.h.b16 %v303
        %v374 = vpack.c.b16 %v372, %v370
        %v375 = vpack.c.b16 %v373, %v371
        %v442 = vunpack.c.l.b16 %v304
        %v443 = vunpack.c.h.b16 %v304
        %v444 = vunpack.c.l.b16 %v305
        %v445 = vunpack.c.l.b16 %v306
        %v446 = vunpack.c.h.b16 %v306
        %v447 = vunpack.c.l.b16 %v307
        %v448 = vunpack.c.l.b16 %v308
        %v449 = vunpack.c.h.b16 %v308
        %v450 = vunpack.c.l.b16 %v309
        %v451 = vunpack.c.l.b16 %v310
        %v452 = vunpack.c.h.b16 %v310
        %v453 = vunpack.c.l.b16 %v311
        %v454 = vunpack.c.l.b16 %v312
        %v455 = vunpack.c.h.b16 %v312
        %v456 = vunpack.c.l.b16 %v313
        %v457 = vunpack.c.l.b16 %v314
        %v458 = vunpack.c.h.b16 %v314
        %v459 = vunpack.c.l.b16 %v315
        %v460 = vunpack.c.l.b16 %v316
        %v461 = vunpack.c.h.b16 %v316
        %v462 = vunpack.c.l.b16 %v317
        %v463 = vunpack.c.l.b16 %v318
        %v464 = vunpack.c.h.b16 %v318
        %v465 = vunpack.c.l.b16 %v319
        %v466 = vunpack.c.l.b16 %v320
        %v467 = vunpack.c.h.b16 %v320
        %v468 = vunpack.c.l.b16 %v321
        %v469 = vunpack.c.l.b16 %v322
        %v470 = vunpack.c.h.b16 %v322
        %v471 = vunpack.c.l.b16 %v323
        %v472 = vunpack.c.l.b16 %v324
        %v473 = vunpack.c.h.b16 %v324
        %v474 = vunpack.c.l.b16 %v325
        %v475 = vunpack.c.l.b16 %v326
        %v476 = vunpack.c.h.b16 %v326
        %v477 = vunpack.c.l.b16 %v327
        %v478 = vunpack.c.l.b16 %v328
        %v479 = vunpack.c.h.b16 %v328
        %v480 = vunpack.c.l.b16 %v329
        %v481 = vunpack.c.l.b16 %v330
        %v482 = vunpack.c.h.b16 %v330
        %v483 = vunpack.c.l.b16 %v331
        %v484 = vunpack.c.l.b16 %v332
        %v485 = vunpack.c.h.b16 %v332
        %v486 = vunpack.c.l.b16 %v333
        %v487 = vunpack.c.l.b16 %v334
        %v488 = vunpack.c.h.b16 %v334
        %v489 = vunpack.c.l.b16 %v335
        %v490 = vunpack.c.l.b16 %v336
        %v491 = vunpack.c.h.b16 %v336
        %v492 = vunpack.c.l.b16 %v337
        %v493 = vunpack.c.l.b16 %v338
        %v494 = vunpack.c.h.b16 %v338
        %v495 = vunpack.c.l.b16 %v339
        %v496 = vunpack.c.l.b16 %v340
        %v497 = vunpack.c.h.b16 %v340
        %v498 = vunpack.c.l.b16 %v341
        %v499 = vunpack.c.l.b16 %v342
        %v500 = vunpack.c.h.b16 %v342
        %v501 = vunpack.c.l.b16 %v343
        %v502 = vunpack.c.l.b16 %v344
        %v503 = vunpack.c.h.b16 %v344
        %v504 = vunpack.c.l.b16 %v345
        %v505 = vunpack.c.l.b16 %v346
        %v506 = vunpack.c.h.b16 %v346
        %v507 = vunpack.c.l.b16 %v347
        %v508 = vunpack.c.l.b16 %v348
        %v509 = vunpack.c.h.b16 %v348
        %v510 = vunpack.c.l.b16 %v349
        %v511 = vunpack.c.l.b16 %v350
        %v512 = vunpack.c.h.b16 %v350
        %v513 = vunpack.c.l.b16 %v351
        %v514 = vunpack.c.l.b16 %v352
        %v515 = vunpack.c.h.b16 %v352
        %v516 = vunpack.c.l.b16 %v353
        %v517 = vunpack.c.l.b16 %v354
        %v518 = vunpack.c.h.b16 %v354
        %v519 = vunpack.c.l.b16 %v355
        %v520 = vunpack.c.l.b16 %v356
        %v521 = vunpack.c.h.b16 %v356
        %v522 = vunpack.c.l.b16 %v357
        %v523 = vunpack.c.l.b16 %v358
        %v524 = vunpack.c.h.b16 %v358
        %v525 = vunpack.c.l.b16 %v359
        %v526 = vunpack.c.l.b16 %v360
        %v527 = vunpack.c.h.b16 %v360
        %v528 = vunpack.c.l.b16 %v361
        %v529 = vunpack.c.l.b16 %v362
        %v530 = vunpack.c.h.b16 %v362
        %v531 = vunpack.c.l.b16 %v363
        %v532 = vunpack.c.l.b16 %v364
        %v533 = vunpack.c.h.b16 %v364
        %v534 = vunpack.c.l.b16 %v365
        %v535 = vunpack.c.l.b16 %v366
        %v536 = vunpack.c.h.b16 %v366
        %v537 = vunpack.c.l.b16 %v367
        %v538 = vpack.c.b16 %v445, %v442
        %v539 = vpack.c.b16 %v446, %v443
        %v540 = vpack.c.b16 %v447, %v444
        %v541 = vpack.c.b16 %v451, %v448
        %v542 = vpack.c.b16 %v452, %v449
        %v543 = vpack.c.b16 %v453, %v450
        %v544 = vpack.c.b16 %v457, %v454
        %v545 = vpack.c.b16 %v458, %v455
        %v546 = vpack.c.b16 %v459, %v456
        %v547 = vpack.c.b16 %v463, %v460
        %v548 = vpack.c.b16 %v464, %v461
        %v549 = vpack.c.b16 %v465, %v462
        %v550 = vpack.c.b16 %v469, %v466
        %v551 = vpack.c.b16 %v470, %v467
        %v552 = vpack.c.b16 %v471, %v468
        %v553 = vpack.c.b16 %v475, %v472
        %v554 = vpack.c.b16 %v476, %v473
        %v555 = vpack.c.b16 %v477, %v474
        %v556 = vpack.c.b16 %v481, %v478
        %v557 = vpack.c.b16 %v482, %v479
        %v558 = vpack.c.b16 %v483, %v480
        %v559 = vpack.c.b16 %v487, %v484
        %v560 = vpack.c.b16 %v488, %v485
        %v561 = vpack.c.b16 %v489, %v486
        %v562 = vpack.c.b16 %v493, %v490
        %v563 = vpack.c.b16 %v494, %v491
        %v564 = vpack.c.b16 %v495, %v492
        %v565 = vpack.c.b16 %v499, %v496
        %v566 = vpack.c.b16 %v500, %v497
        %v567 = vpack.c.b16 %v501, %v498
        %v568 = vpack.c.b16 %v505, %v502
        %v569 = vpack.c.b16 %v506, %v503
        %v570 = vpack.c.b16 %v507, %v504
        %v571 = vpack.c.b16 %v511, %v508
        %v572 = vpack.c.b16 %v512, %v509
        %v573 = vpack.c.b16 %v513, %v510
        %v574 = vpack.c.b16 %v517, %v514
        %v575 = vpack.c.b16 %v518, %v515
        %v576 = vpack.c.b16 %v519, %v516
        %v577 = vpack.c.b16 %v523, %v520
        %v578 = vpack.c.b16 %v524, %v521
        %v579 = vpack.c.b16 %v525, %v522
        %v580 = vpack.c.b16 %v529, %v526
        %v581 = vpack.c.b16 %v530, %v527
        %v582 = vpack.c.b16 %v531, %v528
        %v583 = vpack.c.b16 %v535, %v532
        %v584 = vpack.c.b16 %v536, %v533
        %v585 = vpack.c.b16 %v537, %v534
        %634 = vmatprep.subr.bf16.mxu0 %v560
        %635 = vmatpush1.bf16.msra.mxu0 %v559
        %636 = vmatprep.subr.bf16.mxu0 %v557
        %637 = vmatpush1.bf16.msra.mxu0 %v556
        %638 = vmatprep.subr.bf16.mxu0 %v554
        %639 = vmatpush1.bf16.msra.mxu0 %v553
        %640 = vmatprep.subr.bf16.mxu0 %v551
        %641 = vmatpush1.bf16.msra.mxu0 %v550
        %642 = vmatprep.subr.bf16.mxu0 %v548
        %643 = vmatpush1.bf16.msra.mxu0 %v547
        %644 = vmatprep.subr.bf16.mxu0 %v545
        %645 = vmatpush1.bf16.msra.mxu0 %v544
        %646 = vmatprep.subr.bf16.mxu0 %v542
        %647 = vmatpush1.bf16.msra.mxu0 %v541
        %648 = vmatprep.subr.bf16.mxu0 %v539
        %649 = vmatpush1.bf16.msra.mxu0 %v538
        %650 = vmatprep.subr.bf16.mxu0 %v584
        %651 = vmatpush2.bf16.msra.mxu0 %v583
        %652 = vmatprep.subr.bf16.mxu0 %v581
        %653 = vmatpush2.bf16.msra.mxu0 %v580
        %654 = vmatprep.subr.bf16.mxu0 %v578
        %655 = vmatpush2.bf16.msra.mxu0 %v577
        %656 = vmatprep.subr.bf16.mxu0 %v575
        %657 = vmatpush2.bf16.msra.mxu0 %v574
        %658 = vmatprep.subr.bf16.mxu0 %v572
        %659 = vmatpush2.bf16.msra.mxu0 %v571
        %660 = vmatprep.subr.bf16.mxu0 %v569
        %661 = vmatpush2.bf16.msra.mxu0 %v568
        %662 = vmatprep.subr.bf16.mxu0 %v566
        %663 = vmatpush2.bf16.msra.mxu0 %v565
        %664 = vmatprep.subr.bf16.mxu0 %v563
        %665 = vmatpush2.bf16.msra.mxu0 %v562
        %666 = vmatprep.mubr.bf16.mxu0 %v375
        %667 = vmatmul.mubr.bf16.gmra.mxu0 %v374
        %v668 = vpop.f32.mrf.mxu0
        %v669 = vadd.f32 0.0, %v668
        %v670 = vpop.f32.mrf.mxu0
        %v671 = vadd.f32 0.0, %v670
        %v672 = vpop.f32.mrf.mxu0
        %v673 = vadd.f32 0.0, %v672
        %v674 = vpop.f32.mrf.mxu0
        %v675 = vadd.f32 0.0, %v674
        %676 = vdwg.mxu0
        %677 = vmatprep.subr.bf16.mxu0 0
        %678 = vmatpush1.bf16.msra.mxu0 %v561
        %679 = vmatprep.subr.bf16.mxu0 0
        %680 = vmatpush1.bf16.msra.mxu0 %v558
        %681 = vmatprep.subr.bf16.mxu0 0
        %682 = vmatpush1.bf16.msra.mxu0 %v555
        %683 = vmatprep.subr.bf16.mxu0 0
        %684 = vmatpush1.bf16.msra.mxu0 %v552
        %685 = vmatprep.subr.bf16.mxu0 0
        %686 = vmatpush1.bf16.msra.mxu0 %v549
        %687 = vmatprep.subr.bf16.mxu0 0
        %688 = vmatpush1.bf16.msra.mxu0 %v546
        %689 = vmatprep.subr.bf16.mxu0 0
        %690 = vmatpush1.bf16.msra.mxu0 %v543
        %691 = vmatprep.subr.bf16.mxu0 0
        %692 = vmatpush1.bf16.msra.mxu0 %v540
        %693 = vmatprep.subr.bf16.mxu0 0
        %694 = vmatpush2.bf16.msra.mxu0 %v585
        %695 = vmatprep.subr.bf16.mxu0 0
        %696 = vmatpush2.bf16.msra.mxu0 %v582
        %697 = vmatprep.subr.bf16.mxu0 0
        %698 = vmatpush2.bf16.msra.mxu0 %v579
        %699 = vmatprep.subr.bf16.mxu0 0
        %700 = vmatpush2.bf16.msra.mxu0 %v576
        %701 = vmatprep.subr.bf16.mxu0 0
        %702 = vmatpush2.bf16.msra.mxu0 %v573
        %703 = vmatprep.subr.bf16.mxu0 0
        %704 = vmatpush2.bf16.msra.mxu0 %v570
        %705 = vmatprep.subr.bf16.mxu0 0
        %706 = vmatpush2.bf16.msra.mxu0 %v567
        %707 = vmatprep.subr.bf16.mxu0 0
        %708 = vmatpush2.bf16.msra.mxu0 %v564
        %709 = vmatprep.mubr.bf16.mxu0 %v375
        %710 = vmatmul.mubr.bf16.gmra.mxu0 %v374
        %v711 = vpop.f32.mrf.mxu0
        %v712 = vadd.f32 0.0, %v711
        %v713 = vpop.f32.mrf.mxu0
        %v714 = vpop.f32.mrf.mxu0
        %v715 = vadd.f32 0.0, %v714
        %v716 = vpop.f32.mrf.mxu0
        %717 = vdwg.mxu0
        %v718 = vadd.f32 %v296, %v669
        %v719 = vadd.f32 %v297, %v671
        %v720 = vadd.f32 %v298, %v712
        %v721 = vadd.f32 %v299, %v673
        %v722 = vadd.f32 %v300, %v675
        %v723 = vadd.f32 %v301, %v715
        %724 = vst [vmem:[#allocation2] sm:$0xff] %v718
        %725 = vst [vmem:[#allocation2 + $0x8] sm:$0xff] %v719
        %726 = vst [vmem:[#allocation2 + $0x10] sm:$0xff] %v720
        %727 = vst [vmem:[#allocation2 + $0x18] sm:$0xff] %v721
        %728 = vst [vmem:[#allocation2 + $0x20] sm:$0xff] %v722
        %729 = vst [vmem:[#allocation2 + $0x28] sm:$0xff] %v723
        // Predicated region
        $region49: #{tpu_custom_call.1} parent=31 // pred_check
          %p730 = pneg %p286
        $region50: #{tpu_custom_call.1} parent=31 // pred_check_branch
          %732 = sbr.rel (%p730) target = $region52
        $region51: #{tpu_custom_call.1} parent=31 // pred_region
          %v733 = vld [vmem:[#allocation2] sm:$0xff]
          %v734 = vld [vmem:[#allocation2 + $0x8] sm:$0xff]
          %v735 = vld [vmem:[#allocation2 + $0x10] sm:$0xff]
          %v736 = vld [vmem:[#allocation2 + $0x18] sm:$0xff]
          %v737 = vld [vmem:[#allocation2 + $0x20] sm:$0xff]
          %v738 = vld [vmem:[#allocation2 + $0x28] sm:$0xff]
          %v739 = vld [vmem:[%s250] sm:$0x7]
          %v741 = vlaneseq
          %v742 = vshrl.u32 %v741, 7
          %v743 = vsub.s32 0, %v742
          %v744 = vrot.slane %v739, %v743
          %v745 = vlaneseq
          %v746 = vshrl.u32 %v745, 7
          %v747 = vsub.s32 1, %v746
          %v748 = vrot.slane %v739, %v747
          %v749 = vlaneseq
          %v750 = vshrl.u32 %v749, 7
          %v751 = vsub.s32 2, %v750
          %v752 = vrot.slane %v739, %v751
          %v756 = vadd.f32 %v733, %v744
          %v757 = vadd.f32 %v734, %v748
          %v758 = vadd.f32 %v735, %v752
          %v759 = vadd.f32 %v736, %v744
          %v760 = vadd.f32 %v737, %v748
          %v761 = vadd.f32 %v738, %v752
          %v762 = vpack.c.bf16 %v759, %v756
          %v763 = vpack.c.bf16 %v760, %v757
          %v764 = vpack.c.bf16 %v761, %v758
          %v768 = vunpack.c.l.b16 %v762
          %v769 = vunpack.c.l.b16 %v763
          %v770 = vunpack.c.l.b16 %v764
          %v771 = vunpack.c.h.b16 %v762
          %v772 = vunpack.c.h.b16 %v763
          %v773 = vunpack.c.h.b16 %v764
          %v774 = vpack.c.b16 %v769, %v768
          %v775 = vpack.c.b16 %v770, %v770
          %v776 = vpack.c.b16 %v772, %v771
          %v777 = vpack.c.b16 %v773, %v773
          %782 = vst [vmem:[%s277] sm:$0xff] %v774
          %783 = vst [vmem:[%s277 + $0x8] sm:$0xf] %v775
          %784 = vst [vmem:[%s277 + $0xc] sm:$0xff] %v776
          %785 = vst [vmem:[%s277 + $0x14] sm:$0xf] %v777
        $region52: #{tpu_custom_call.1} parent=31 // pred_fallthru
          _
        %s786 = sand.u32 %s132, 1
        %s787 = scalar_lea.sflag [#allocation5], %s786
        %s788 = sand.u32 %s132, 1
        %s789 = smul.addr %s788, 24
        %s790 = scalar_lea.vmem [#allocation9], %s789
        // Predicated region
        $region53: #{tpu_custom_call.1} parent=31 // pred_check
          %p791 = pneg %p142
        $region54: #{tpu_custom_call.1} parent=31 // pred_check_branch
          %793 = sbr.rel (%p791) target = $region56
        $region55: #{tpu_custom_call.1} parent=31 // pred_region
          %s794 = smul.u32 2, %s26
          %s795 = smul.u32 3, %s27
          %s797 = ssub.s32 384, 384
          %798 = vsyncadd %s787, %s797
          %s799 = smul.addr %s794, 6
          %s800 = sadd.s32 %s795, %s799
          %s801 = smul.addr %s800, 64
          %s802 = scalar_lea.hbm %s3, %s801
          %s803 = sshll.u32 %s790, 4
          %s804 = int_to_ptr.vmem [resolvable:$true] %s803
          %809 = dma.vmem_to_hbm [thread:$0]  %s804, 384, %s802, %s787, 192, 384, 12
        $region56: #{tpu_custom_call.1} parent=31 // pred_fallthru
          _
      $region32: #{tpu_custom_call.1} parent=5 // pred_fallthru
        _
      %p810 = scmp.le.s32.totalorder 2, %s16
      // Predicated region
      $region57: #{tpu_custom_call.1} parent=5 // pred_check
        %p811 = pneg %p810
      $region58: #{tpu_custom_call.1} parent=5 // pred_check_branch
        %813 = sbr.rel (%p811) target = $region60
      $region59: #{tpu_custom_call.1} parent=5 // pred_region
        %s814 = ssub.s32 %s16, 2
        // Predicated region
        $region61: #{tpu_custom_call.1} parent=59 // pred_check
          %p815 = pneg %p148
        $region62: #{tpu_custom_call.1} parent=59 // pred_check_branch
          %817 = sbr.rel (%p815) target = $region64
        $region63: #{tpu_custom_call.1} parent=59 // pred_region
          %s818 = sand.u32 %s133, 1
          %s819 = scalar_lea.sflag [#allocation5], %s818
          %s820 = sand.u32 %s133, 1
          %s821 = smul.addr %s820, 24
          %s822 = scalar_lea.vmem [#allocation9], %s821
          %823 = dma.done %s819, 384
        $region64: #{tpu_custom_call.1} parent=59 // pred_fallthru
          _
      $region60: #{tpu_custom_call.1} parent=5 // pred_fallthru
        _
    $region6: #{tpu_custom_call.1} parent=1 // loop_footer
      %s20 = sadd.s32 1, %s16
    $region7: #{tpu_custom_call.1} parent=1 // loop_footer_branch
      %15 = sbr.rel target = $region3
    $region8: #{tpu_custom_call.1} parent=1 // loop_exit
      _
    %824 = vsyncpa [#allocation4], 1
    %s825 = scalar_lea.sflag [#allocation4], 1
    %826 = vsyncpa %s825, 1
    %827 = vsyncpa [#allocation7], 1
    %s828 = scalar_lea.sflag [#allocation7], 1
    %829 = vsyncpa %s828, 1
    %830 = vsyncpa [#allocation5], 1
    %s831 = scalar_lea.sflag [#allocation5], 1
    %832 = vsyncpa %s831, 1

</llo_original>
